<compile_context>
chip_gen: v6e
topology: v6e:2x2x1
jax: 0.10.0
libtpu: 0.0.40
codegen_flags: <defaults>
</compile_context>

<pallas_src>
import functools

import jax
import jax.numpy as jnp
from jax.experimental import pallas as pl
from jax.experimental.pallas import tpu as pltpu

LANE = 128
SUBLANE = 8


def _round_up(x, m):
    return (x + m - 1) // m * m


def _mlp_kernel(s_ref, a_ref,
                w1s_ref, w1a_ref, b1_ref,
                w2_ref, b2_ref,
                w3_ref, b3_ref,
                out_ref):
    """fc1+ReLU -> fc2+ReLU -> fused [fc3s | fc3r] head, `+ s` folded in.

    Matmul operands use the weights' dtype (bf16 by default); accumulation,
    bias-add and ReLU stay in f32.
    """
    s = s_ref[...]                                   # (tb, state_dim) f32
    w1s = w1s_ref[...]
    mm = w1s.dtype                                   # matmul operand dtype

    # fc1 + relu.  concat([s, a]) @ w1 == s @ w1[:S] + a @ w1[S:]  -> s is
    # DMA'd once and there is no concat materialized in HBM.
    # TODO(synk): an in-kernel lane concat of [s, a] would fuse these two
    # small-K dots into one MXU pass; negligible next to the hid x hid fc2.
    h1 = (jnp.dot(s.astype(mm), w1s, preferred_element_type=jnp.float32)
          + jnp.dot(a_ref[...].astype(mm), w1a_ref[...],
                    preferred_element_type=jnp.float32)
          + b1_ref[...])
    h1 = jnp.maximum(h1, 0.0)

    # fc2 + relu
    h2 = jnp.dot(h1.astype(mm), w2_ref[...],
                 preferred_element_type=jnp.float32) + b2_ref[...]
    h2 = jnp.maximum(h2, 0.0)

    # Fused head: columns [0, state_dim) = fc3s, column state_dim = fc3r,
    # remaining columns are zero padding -> single lane-dense (unmasked) store.
    y = jnp.dot(h2.astype(mm), w3_ref[...],
                preferred_element_type=jnp.float32) + b3_ref[...]
    out_ref[...] = y.astype(out_ref.dtype)

    # Fold the `+ s` residual here (s already VMEM resident): overwrite the
    # first state_dim lanes.  This is a cheap masked VMEM store; the HBM
    # writeback is still the single lane-dense block DMA.
    sd = s.shape[-1]
    out_ref[:, :sd] = (y[:, :sd] + s).astype(out_ref.dtype)


def _prepare_padded_params(params, state_dim, matmul_dtype):
    """Split w1, fuse + lane-pad the output head, lane-pad hid_dim, and cast
    matmul weights to `matmul_dtype` (biases stay f32).

    In production this runs once at parameter-load time.
    """
    w1, b1, w2, b2, w3s, b3s, w3r, b3r = params
    hid = w1.shape[1]
    hid_p = _round_up(hid, LANE)
    out_dim = state_dim + 1
    out_p = _round_up(out_dim, LANE)
    ph = hid_p - hid

    w1s = jnp.pad(w1[:state_dim], ((0, 0), (0, ph))).astype(matmul_dtype)
    w1a = jnp.pad(w1[state_dim:], ((0, 0), (0, ph))).astype(matmul_dtype)
    b1p = jnp.pad(b1, ((0, 0), (0, ph)))
    w2p = jnp.pad(w2, ((0, ph), (0, ph))).astype(matmul_dtype)
    b2p = jnp.pad(b2, ((0, 0), (0, ph)))
    w3 = jnp.concatenate([w3s, w3r], axis=1)                      # (hid, S+1)
    w3p = jnp.pad(w3, ((0, ph), (0, out_p - out_dim))).astype(matmul_dtype)
    b3 = jnp.concatenate([b3s, b3r], axis=1)
    b3p = jnp.pad(b3, ((0, 0), (0, out_p - out_dim)))
    return (w1s, w1a, b1p, w2p, b2p, w3p, b3p), out_p


def _pick_row_tile(batch, block_rows):
    """Largest row tile <= block_rows, with >= 2 grid steps when possible
    (keeps v7x's second TensorCore busy; rows stay a multiple of 8)."""
    if batch <= SUBLANE:
        return batch
    tb = min(block_rows, max(SUBLANE, _round_up(pl.cdiv(batch, 2), SUBLANE)))
    return min(tb, _round_up(batch, SUBLANE))


@functools.partial(
    jax.jit,
    static_argnames=("block_rows", "matmul_dtype", "single_buffer_weights"))
def _mlp_forward_impl(s, a, params, *, block_rows, matmul_dtype,
                      single_buffer_weights):
    B, state_dim = s.shape
    ac_dim = a.shape[1]
    (w1s, w1a, b1p, w2p, b2p, w3p, b3p), out_p = _prepare_padded_params(
        params, state_dim, matmul_dtype)
    weights = (w1s, w1a, b1p, w2p, b2p, w3p, b3p)
    hid_p = w2p.shape[0]
    in_dim = state_dim + ac_dim

    # Big row tiles amortize the ~0.35us/step pipeline overhead.
    tb = _pick_row_tile(B, block_rows)
    grid = (pl.cdiv(B, tb),)

    # Explicit scoped-VMEM budget (v5e default is only 16 MiB; v7x has
    # 64 MiB physical).
    f32b = 4
    w_bytes = sum(int(x.size) * x.dtype.itemsize for x in weights)
    w_bytes *= 1 if single_buffer_weights else 2
    io_bytes = 2 * tb * (in_dim + out_p) * f32b          # double-buffered I/O
    act_bytes = 4 * tb * hid_p * f32b                    # h1/h2 + slack
    need = w_bytes + io_bytes + act_bytes
    vmem_limit = int(min(max(2 * need, 16 * 2 ** 20), 64 * 2 ** 20))

    cost = pl.CostEstimate(
        flops=int(2 * B * (in_dim * hid_p + hid_p * hid_p + hid_p * out_p)),
        transcendentals=0,
        bytes_accessed=int(B * (in_dim + out_p) * f32b + w_bytes))

    def row_spec(d):
        return pl.BlockSpec((tb, d), lambda i: (i, 0))

    def resident_spec(arr):
        # Constant block index -> fetched once, VMEM-resident across row tiles.
        # Buffered(1) keeps a single copy instead of the default double buffer.
        if single_buffer_weights:
            return pl.BlockSpec(arr.shape, lambda i: (0, 0),
                                pipeline_mode=pl.Buffered(1))
        return pl.BlockSpec(arr.shape, lambda i: (0, 0))

    slab = pl.pallas_call(
        _mlp_kernel,
        out_shape=jax.ShapeDtypeStruct((B, out_p), s.dtype),
        grid=grid,
        in_specs=[row_spec(state_dim), row_spec(ac_dim)]
                 + [resident_spec(w) for w in weights],
        out_specs=row_spec(out_p),
        compiler_params=pltpu.CompilerParams(
            # TODO(synk): on v7x verify "parallel" shards the row grid across
            # both TensorCores; otherwise switch to pltpu.CORE_PARALLEL.
            dimension_semantics=("parallel",),
            vmem_limit_bytes=vmem_limit),
        cost_estimate=cost,
    )(s, a, *weights)

    # Residual already applied in-kernel -> epilogue is pure slicing.
    # TODO(synk): on v5e, benchmark this 128-lane padded slab against direct
    # (B, state_dim)/(B, 1) masked-store outputs.
    d_plus_s = slab[:, :state_dim]
    r = slab[:, state_dim:state_dim + 1]
    return d_plus_s, r


def mlp_forward(s, a, params, *, block_rows=1024, matmul_dtype=jnp.bfloat16):
    """Pallas-backed forward of MLP: returns (d + s, r)."""
    try:
        return _mlp_forward_impl(s, a, params, block_rows=block_rows,
                                 matmul_dtype=matmul_dtype,
                                 single_buffer_weights=True)
    except Exception:
        # Fallback for jax builds where BlockSpec.pipeline_mode / Buffered(1)
        # is not supported by pallas_call (double-buffered resident weights).
        return _mlp_forward_impl(s, a, params, block_rows=block_rows,
                                 matmul_dtype=matmul_dtype,
                                 single_buffer_weights=False)


def init_params(key, state_dim, ac_dim, hid_dim):
    """Deterministic parameter init; weights stored as (in, out)."""
    ks = jax.random.split(key, 8)
    in_dim = state_dim + ac_dim

    def lin(kw, kb, fan_in, fan_out):
        # uniform(-1/sqrt(fan_in), 1/sqrt(fan_in)) like PyTorch's default
        bound = 1.0 / jnp.sqrt(jnp.float32(fan_in))
        w = jax.random.uniform(kw, (fan_in, fan_out), jnp.float32, -bound, bound)
        b = jax.random.uniform(kb, (1, fan_out), jnp.float32, -bound, bound)
        return w, b

    w1, b1 = lin(ks[0], ks[1], in_dim, hid_dim)
    w2, b2 = lin(ks[2], ks[3], hid_dim, hid_dim)
    w3s, b3s = lin(ks[4], ks[5], hid_dim, state_dim)
    w3r, b3r = lin(ks[6], ks[7], hid_dim, 1)
    return (w1, b1, w2, b2, w3s, b3s, w3r, b3r)


def _reference_forward(s, a, params):
    """Pure-JAX (f32) reference matching the PyTorch module."""
    w1, b1, w2, b2, w3s, b3s, w3r, b3r = params
    x = jnp.concatenate([s, a], axis=-1)
    h1 = jnp.maximum(x @ w1 + b1, 0.0)
    h2 = jnp.maximum(h1 @ w2 + b2, 0.0)
    d = h2 @ w3s + b3s
    r = h2 @ w3r + b3r
    return d + s, r


if __name__ == "__main__":
    # Small shapes consistent with the module: batch=8, state=16, ac=16, hid=32.
    batch, state_dim, ac_dim, hid_dim = 8, 16, 16, 32
    key = jax.random.PRNGKey(0)
    k_s, k_a, k_p = jax.random.split(key, 3)
    s = jax.random.normal(k_s, (batch, state_dim), jnp.float32)
    a = jax.random.normal(k_a, (batch, ac_dim), jnp.float32)
    params = init_params(k_p, state_dim, ac_dim, hid_dim)

    d_plus_s, r = mlp_forward(s, a, params)
    jax.block_until_ready((d_plus_s, r))

    d_ref, r_ref = _reference_forward(s, a, params)
    assert d_plus_s.shape == (batch, state_dim) and r.shape == (batch, 1)
    # bf16 matmul operands (f32 accumulation) vs f32 reference -> relaxed tol.
    assert jnp.allclose(d_plus_s, d_ref, atol=5e-2, rtol=5e-2)
    assert jnp.allclose(r, r_ref, atol=5e-2, rtol=5e-2)

    # Second check: module-default hid_dim=512 and a batch that exercises a
    # multi-step ("parallel") row grid with VMEM-resident weights.
    batch2, hid2 = 192, 512
    k_s2, k_a2, k_p2 = jax.random.split(jax.random.PRNGKey(1), 3)
    s2 = jax.random.normal(k_s2, (batch2, state_dim), jnp.float32)
    a2 = jax.random.normal(k_a2, (batch2, ac_dim), jnp.float32)
    params2 = init_params(k_p2, state_dim, ac_dim, hid2)
    d2, r2 = mlp_forward(s2, a2, params2)
    jax.block_until_ready((d2, r2))
    d2_ref, r2_ref = _reference_forward(s2, a2, params2)
    assert d2.shape == (batch2, state_dim) and r2.shape == (batch2, 1)
    assert jnp.allclose(d2, d2_ref, atol=5e-2, rtol=5e-2)
    assert jnp.allclose(r2, r2_ref, atol=5e-2, rtol=5e-2)

    print("KERNEL_OK")
</pallas_src>

<mosaic_0001>
module attributes {stable_mosaic.version = 11 : i64} {
  func.func @_mlp_kernel(%arg0: i32, %arg1: memref<8x16xf32, #tpu.memory_space<vmem>>, %arg2: memref<8x16xf32, #tpu.memory_space<vmem>>, %arg3: memref<16x128xbf16, #tpu.memory_space<vmem>>, %arg4: memref<16x128xbf16, #tpu.memory_space<vmem>>, %arg5: memref<1x128xf32, #tpu.memory_space<vmem>>, %arg6: memref<128x128xbf16, #tpu.memory_space<vmem>>, %arg7: memref<1x128xf32, #tpu.memory_space<vmem>>, %arg8: memref<128x128xbf16, #tpu.memory_space<vmem>>, %arg9: memref<1x128xf32, #tpu.memory_space<vmem>>, %arg10: memref<8x128xf32, #tpu.memory_space<vmem>>) attributes {dimension_semantics = [#tpu.dimension_semantics<parallel>], iteration_bounds = array<i64: 1>, scalar_prefetch = 0 : i64, scratch_operands = 0 : i64, tpu.core_type = #tpu.core_type<tc>, window_params = [{transform_indices = @transform_0, window_bounds = array<i64: 8, 16>}, {transform_indices = @transform_1, window_bounds = array<i64: 8, 16>}, {pipeline_mode = #tpu.pipeline_mode<synchronous>, transform_indices = @transform_2, window_bounds = array<i64: 16, 128>}, {pipeline_mode = #tpu.pipeline_mode<synchronous>, transform_indices = @transform_3, window_bounds = array<i64: 16, 128>}, {pipeline_mode = #tpu.pipeline_mode<synchronous>, transform_indices = @transform_4, window_bounds = array<i64: 1, 128>}, {pipeline_mode = #tpu.pipeline_mode<synchronous>, transform_indices = @transform_5, window_bounds = array<i64: 128, 128>}, {pipeline_mode = #tpu.pipeline_mode<synchronous>, transform_indices = @transform_6, window_bounds = array<i64: 1, 128>}, {pipeline_mode = #tpu.pipeline_mode<synchronous>, transform_indices = @transform_7, window_bounds = array<i64: 128, 128>}, {pipeline_mode = #tpu.pipeline_mode<synchronous>, transform_indices = @transform_8, window_bounds = array<i64: 1, 128>}, {transform_indices = @transform_9, window_bounds = array<i64: 8, 128>}]} {
    %c0 = arith.constant 0 : index
    %c0_0 = arith.constant 0 : index
    %0 = vector.load %arg1[%c0, %c0_0] : memref<8x16xf32, #tpu.memory_space<vmem>>, vector<8x16xf32>
    %c0_1 = arith.constant 0 : index
    %c0_2 = arith.constant 0 : index
    %1 = vector.load %arg3[%c0_1, %c0_2] : memref<16x128xbf16, #tpu.memory_space<vmem>>, vector<16x128xbf16>
    %2 = arith.truncf %0 : vector<8x16xf32> to vector<8x16xbf16>
    %cst = arith.constant dense<0.000000e+00> : vector<8x128xf32>
    %3 = tpu.matmul %2, %1, %cst {dimension_numbers = #tpu.dot_dimension_numbers<[1], [0], [0], [1], [0, 0, 1, 1], [], []>} : vector<8x16xbf16>, vector<16x128xbf16>, vector<8x128xf32> -> vector<8x128xf32>
    %c0_3 = arith.constant 0 : index
    %c0_4 = arith.constant 0 : index
    %4 = vector.load %arg2[%c0_3, %c0_4] : memref<8x16xf32, #tpu.memory_space<vmem>>, vector<8x16xf32>
    %5 = arith.truncf %4 : vector<8x16xf32> to vector<8x16xbf16>
    %c0_5 = arith.constant 0 : index
    %c0_6 = arith.constant 0 : index
    %6 = vector.load %arg4[%c0_5, %c0_6] : memref<16x128xbf16, #tpu.memory_space<vmem>>, vector<16x128xbf16>
    %cst_7 = arith.constant dense<0.000000e+00> : vector<8x128xf32>
    %7 = tpu.matmul %5, %6, %cst_7 {dimension_numbers = #tpu.dot_dimension_numbers<[1], [0], [0], [1], [0, 0, 1, 1], [], []>} : vector<8x16xbf16>, vector<16x128xbf16>, vector<8x128xf32> -> vector<8x128xf32>
    %8 = arith.addf %3, %7 : vector<8x128xf32>
    %c0_8 = arith.constant 0 : index
    %c0_9 = arith.constant 0 : index
    %9 = vector.load %arg5[%c0_8, %c0_9] : memref<1x128xf32, #tpu.memory_space<vmem>>, vector<1x128xf32>
    %10 = vector.broadcast %9 : vector<1x128xf32> to vector<8x128xf32>
    %11 = arith.addf %8, %10 : vector<8x128xf32>
    %cst_10 = arith.constant 0.000000e+00 : f32
    %12 = vector.broadcast %cst_10 : f32 to vector<8x128xf32>
    %13 = arith.maximumf %11, %12 : vector<8x128xf32>
    %14 = arith.truncf %13 : vector<8x128xf32> to vector<8x128xbf16>
    %c0_11 = arith.constant 0 : index
    %c0_12 = arith.constant 0 : index
    %15 = vector.load %arg6[%c0_11, %c0_12] : memref<128x128xbf16, #tpu.memory_space<vmem>>, vector<128x128xbf16>
    %cst_13 = arith.constant dense<0.000000e+00> : vector<8x128xf32>
    %16 = tpu.matmul %14, %15, %cst_13 {dimension_numbers = #tpu.dot_dimension_numbers<[1], [0], [0], [1], [0, 0, 1, 1], [], []>} : vector<8x128xbf16>, vector<128x128xbf16>, vector<8x128xf32> -> vector<8x128xf32>
    %c0_14 = arith.constant 0 : index
    %c0_15 = arith.constant 0 : index
    %17 = vector.load %arg7[%c0_14, %c0_15] : memref<1x128xf32, #tpu.memory_space<vmem>>, vector<1x128xf32>
    %18 = vector.broadcast %17 : vector<1x128xf32> to vector<8x128xf32>
    %19 = arith.addf %16, %18 : vector<8x128xf32>
    %cst_16 = arith.constant 0.000000e+00 : f32
    %20 = vector.broadcast %cst_16 : f32 to vector<8x128xf32>
    %21 = arith.maximumf %19, %20 : vector<8x128xf32>
    %22 = arith.truncf %21 : vector<8x128xf32> to vector<8x128xbf16>
    %c0_17 = arith.constant 0 : index
    %c0_18 = arith.constant 0 : index
    %23 = vector.load %arg8[%c0_17, %c0_18] : memref<128x128xbf16, #tpu.memory_space<vmem>>, vector<128x128xbf16>
    %cst_19 = arith.constant dense<0.000000e+00> : vector<8x128xf32>
    %24 = tpu.matmul %22, %23, %cst_19 {dimension_numbers = #tpu.dot_dimension_numbers<[1], [0], [0], [1], [0, 0, 1, 1], [], []>} : vector<8x128xbf16>, vector<128x128xbf16>, vector<8x128xf32> -> vector<8x128xf32>
    %c0_20 = arith.constant 0 : index
    %c0_21 = arith.constant 0 : index
    %25 = vector.load %arg9[%c0_20, %c0_21] : memref<1x128xf32, #tpu.memory_space<vmem>>, vector<1x128xf32>
    %26 = vector.broadcast %25 : vector<1x128xf32> to vector<8x128xf32>
    %27 = arith.addf %24, %26 : vector<8x128xf32>
    %c0_22 = arith.constant 0 : index
    %c0_23 = arith.constant 0 : index
    %28 = vector.load %arg10[%c0_22, %c0_23] : memref<8x128xf32, #tpu.memory_space<vmem>>, vector<8x128xf32>
    tpu.vector_store %arg10[%c0_22, %c0_23], %27 {strides = array<i32>} : memref<8x128xf32, #tpu.memory_space<vmem>>, vector<8x128xf32>,
    %29 = vector.extract_strided_slice %27 {offsets = [0, 0], sizes = [8, 16], strides = [1, 1]} : vector<8x128xf32> to vector<8x16xf32>
    %30 = arith.addf %29, %0 : vector<8x16xf32>
    %c0_24 = arith.constant 0 : index
    %c0_25 = arith.constant 0 : index
    %31 = vector.load %arg10[%c0_24, %c0_25] : memref<8x128xf32, #tpu.memory_space<vmem>>, vector<8x16xf32>
    tpu.vector_store %arg10[%c0_24, %c0_25], %30 {strides = array<i32>} : memref<8x128xf32, #tpu.memory_space<vmem>>, vector<8x16xf32>,
    return
  }
  func.func @transform_0(%arg0: i32) -> (i32, i32) {
    %c0_i32 = arith.constant 0 : i32
    %c0_i32_0 = arith.constant 0 : i32
    return %arg0, %c0_i32 : i32, i32
  }
  func.func @transform_1(%arg0: i32) -> (i32, i32) {
    %c0_i32 = arith.constant 0 : i32
    %c0_i32_0 = arith.constant 0 : i32
    return %arg0, %c0_i32 : i32, i32
  }
  func.func @transform_2(%arg0: i32) -> (i32, i32) {
    %c0_i32 = arith.constant 0 : i32
    %c0_i32_0 = arith.constant 0 : i32
    %c0_i32_1 = arith.constant 0 : i32
    return %c0_i32, %c0_i32_0 : i32, i32
  }
  func.func @transform_3(%arg0: i32) -> (i32, i32) {
    %c0_i32 = arith.constant 0 : i32
    %c0_i32_0 = arith.constant 0 : i32
    %c0_i32_1 = arith.constant 0 : i32
    return %c0_i32, %c0_i32_0 : i32, i32
  }
  func.func @transform_4(%arg0: i32) -> (i32, i32) {
    %c0_i32 = arith.constant 0 : i32
    %c0_i32_0 = arith.constant 0 : i32
    %c0_i32_1 = arith.constant 0 : i32
    return %c0_i32, %c0_i32_0 : i32, i32
  }
  func.func @transform_5(%arg0: i32) -> (i32, i32) {
    %c0_i32 = arith.constant 0 : i32
    %c0_i32_0 = arith.constant 0 : i32
    %c0_i32_1 = arith.constant 0 : i32
    return %c0_i32, %c0_i32_0 : i32, i32
  }
  func.func @transform_6(%arg0: i32) -> (i32, i32) {
    %c0_i32 = arith.constant 0 : i32
    %c0_i32_0 = arith.constant 0 : i32
    %c0_i32_1 = arith.constant 0 : i32
    return %c0_i32, %c0_i32_0 : i32, i32
  }
  func.func @transform_7(%arg0: i32) -> (i32, i32) {
    %c0_i32 = arith.constant 0 : i32
    %c0_i32_0 = arith.constant 0 : i32
    %c0_i32_1 = arith.constant 0 : i32
    return %c0_i32, %c0_i32_0 : i32, i32
  }
  func.func @transform_8(%arg0: i32) -> (i32, i32) {
    %c0_i32 = arith.constant 0 : i32
    %c0_i32_0 = arith.constant 0 : i32
    %c0_i32_1 = arith.constant 0 : i32
    return %c0_i32, %c0_i32_0 : i32, i32
  }
  func.func @transform_9(%arg0: i32) -> (i32, i32) {
    %c0_i32 = arith.constant 0 : i32
    %c0_i32_0 = arith.constant 0 : i32
    return %arg0, %c0_i32 : i32, i32
  }
}

module attributes {stable_mosaic.version = 11 : i64} {
  func.func @_mlp_kernel(%arg0: i32, %arg1: memref<8x16xf32, #tpu.memory_space<vmem>>, %arg2: memref<8x16xf32, #tpu.memory_space<vmem>>, %arg3: memref<16x128xbf16, #tpu.memory_space<vmem>>, %arg4: memref<16x128xbf16, #tpu.memory_space<vmem>>, %arg5: memref<1x128xf32, #tpu.memory_space<vmem>>, %arg6: memref<128x128xbf16, #tpu.memory_space<vmem>>, %arg7: memref<1x128xf32, #tpu.memory_space<vmem>>, %arg8: memref<128x128xbf16, #tpu.memory_space<vmem>>, %arg9: memref<1x128xf32, #tpu.memory_space<vmem>>, %arg10: memref<8x128xf32, #tpu.memory_space<vmem>>) attributes {dimension_semantics = [#tpu.dimension_semantics<parallel>], iteration_bounds = array<i64: 1>, scalar_prefetch = 0 : i64, scratch_operands = 0 : i64, tpu.core_type = #tpu.core_type<tc>, window_params = [{transform_indices = @transform_0, window_bounds = array<i64: 8, 16>}, {transform_indices = @transform_1, window_bounds = array<i64: 8, 16>}, {pipeline_mode = #tpu.pipeline_mode<synchronous>, transform_indices = @transform_2, window_bounds = array<i64: 16, 128>}, {pipeline_mode = #tpu.pipeline_mode<synchronous>, transform_indices = @transform_3, window_bounds = array<i64: 16, 128>}, {pipeline_mode = #tpu.pipeline_mode<synchronous>, transform_indices = @transform_4, window_bounds = array<i64: 1, 128>}, {pipeline_mode = #tpu.pipeline_mode<synchronous>, transform_indices = @transform_5, window_bounds = array<i64: 128, 128>}, {pipeline_mode = #tpu.pipeline_mode<synchronous>, transform_indices = @transform_6, window_bounds = array<i64: 1, 128>}, {pipeline_mode = #tpu.pipeline_mode<synchronous>, transform_indices = @transform_7, window_bounds = array<i64: 128, 128>}, {pipeline_mode = #tpu.pipeline_mode<synchronous>, transform_indices = @transform_8, window_bounds = array<i64: 1, 128>}, {transform_indices = @transform_9, window_bounds = array<i64: 8, 128>}]} {
    %c0 = arith.constant 0 : index
    %c0_0 = arith.constant 0 : index
    %0 = vector.load %arg1[%c0, %c0_0] : memref<8x16xf32, #tpu.memory_space<vmem>>, vector<8x16xf32>
    %c0_1 = arith.constant 0 : index
    %c0_2 = arith.constant 0 : index
    %1 = vector.load %arg3[%c0_1, %c0_2] : memref<16x128xbf16, #tpu.memory_space<vmem>>, vector<16x128xbf16>
    %2 = arith.truncf %0 : vector<8x16xf32> to vector<8x16xbf16>
    %cst = arith.constant dense<0.000000e+00> : vector<8x128xf32>
    %3 = tpu.matmul %2, %1, %cst {dimension_numbers = #tpu.dot_dimension_numbers<[1], [0], [0], [1], [0, 0, 1, 1], [], []>} : vector<8x16xbf16>, vector<16x128xbf16>, vector<8x128xf32> -> vector<8x128xf32>
    %c0_3 = arith.constant 0 : index
    %c0_4 = arith.constant 0 : index
    %4 = vector.load %arg2[%c0_3, %c0_4] : memref<8x16xf32, #tpu.memory_space<vmem>>, vector<8x16xf32>
    %5 = arith.truncf %4 : vector<8x16xf32> to vector<8x16xbf16>
    %c0_5 = arith.constant 0 : index
    %c0_6 = arith.constant 0 : index
    %6 = vector.load %arg4[%c0_5, %c0_6] : memref<16x128xbf16, #tpu.memory_space<vmem>>, vector<16x128xbf16>
    %cst_7 = arith.constant dense<0.000000e+00> : vector<8x128xf32>
    %7 = tpu.matmul %5, %6, %cst_7 {dimension_numbers = #tpu.dot_dimension_numbers<[1], [0], [0], [1], [0, 0, 1, 1], [], []>} : vector<8x16xbf16>, vector<16x128xbf16>, vector<8x128xf32> -> vector<8x128xf32>
    %8 = arith.addf %3, %7 : vector<8x128xf32>
    %c0_8 = arith.constant 0 : index
    %c0_9 = arith.constant 0 : index
    %9 = vector.load %arg5[%c0_8, %c0_9] : memref<1x128xf32, #tpu.memory_space<vmem>>, vector<1x128xf32>
    %10 = vector.broadcast %9 : vector<1x128xf32> to vector<8x128xf32>
    %11 = arith.addf %8, %10 : vector<8x128xf32>
    %cst_10 = arith.constant 0.000000e+00 : f32
    %12 = vector.broadcast %cst_10 : f32 to vector<8x128xf32>
    %13 = arith.maximumf %11, %12 : vector<8x128xf32>
    %14 = arith.truncf %13 : vector<8x128xf32> to vector<8x128xbf16>
    %c0_11 = arith.constant 0 : index
    %c0_12 = arith.constant 0 : index
    %15 = vector.load %arg6[%c0_11, %c0_12] : memref<128x128xbf16, #tpu.memory_space<vmem>>, vector<128x128xbf16>
    %cst_13 = arith.constant dense<0.000000e+00> : vector<8x128xf32>
    %16 = tpu.matmul %14, %15, %cst_13 {dimension_numbers = #tpu.dot_dimension_numbers<[1], [0], [0], [1], [0, 0, 1, 1], [], []>} : vector<8x128xbf16>, vector<128x128xbf16>, vector<8x128xf32> -> vector<8x128xf32>
    %c0_14 = arith.constant 0 : index
    %c0_15 = arith.constant 0 : index
    %17 = vector.load %arg7[%c0_14, %c0_15] : memref<1x128xf32, #tpu.memory_space<vmem>>, vector<1x128xf32>
    %18 = vector.broadcast %17 : vector<1x128xf32> to vector<8x128xf32>
    %19 = arith.addf %16, %18 : vector<8x128xf32>
    %cst_16 = arith.constant 0.000000e+00 : f32
    %20 = vector.broadcast %cst_16 : f32 to vector<8x128xf32>
    %21 = arith.maximumf %19, %20 : vector<8x128xf32>
    %22 = arith.truncf %21 : vector<8x128xf32> to vector<8x128xbf16>
    %c0_17 = arith.constant 0 : index
    %c0_18 = arith.constant 0 : index
    %23 = vector.load %arg8[%c0_17, %c0_18] : memref<128x128xbf16, #tpu.memory_space<vmem>>, vector<128x128xbf16>
    %cst_19 = arith.constant dense<0.000000e+00> : vector<8x128xf32>
    %24 = tpu.matmul %22, %23, %cst_19 {dimension_numbers = #tpu.dot_dimension_numbers<[1], [0], [0], [1], [0, 0, 1, 1], [], []>} : vector<8x128xbf16>, vector<128x128xbf16>, vector<8x128xf32> -> vector<8x128xf32>
    %c0_20 = arith.constant 0 : index
    %c0_21 = arith.constant 0 : index
    %25 = vector.load %arg9[%c0_20, %c0_21] : memref<1x128xf32, #tpu.memory_space<vmem>>, vector<1x128xf32>
    %26 = vector.broadcast %25 : vector<1x128xf32> to vector<8x128xf32>
    %27 = arith.addf %24, %26 : vector<8x128xf32>
    %c0_22 = arith.constant 0 : index
    %c0_23 = arith.constant 0 : index
    %28 = vector.load %arg10[%c0_22, %c0_23] : memref<8x128xf32, #tpu.memory_space<vmem>>, vector<8x128xf32>
    tpu.vector_store %arg10[%c0_22, %c0_23], %27 {strides = array<i32>} : memref<8x128xf32, #tpu.memory_space<vmem>>, vector<8x128xf32>,
    %29 = vector.extract_strided_slice %27 {offsets = [0, 0], sizes = [8, 16], strides = [1, 1]} : vector<8x128xf32> to vector<8x16xf32>
    %30 = arith.addf %29, %0 : vector<8x16xf32>
    %c0_24 = arith.constant 0 : index
    %c0_25 = arith.constant 0 : index
    %31 = vector.load %arg10[%c0_24, %c0_25] : memref<8x128xf32, #tpu.memory_space<vmem>>, vector<8x16xf32>
    tpu.vector_store %arg10[%c0_24, %c0_25], %30 {strides = array<i32>} : memref<8x128xf32, #tpu.memory_space<vmem>>, vector<8x16xf32>,
    return
  }
  func.func @transform_0(%arg0: i32) -> (i32, i32) {
    %c0_i32 = arith.constant 0 : i32
    %c0_i32_0 = arith.constant 0 : i32
    return %arg0, %c0_i32 : i32, i32
  }
  func.func @transform_1(%arg0: i32) -> (i32, i32) {
    %c0_i32 = arith.constant 0 : i32
    %c0_i32_0 = arith.constant 0 : i32
    return %arg0, %c0_i32 : i32, i32
  }
  func.func @transform_2(%arg0: i32) -> (i32, i32) {
    %c0_i32 = arith.constant 0 : i32
    %c0_i32_0 = arith.constant 0 : i32
    %c0_i32_1 = arith.constant 0 : i32
    return %c0_i32, %c0_i32_0 : i32, i32
  }
  func.func @transform_3(%arg0: i32) -> (i32, i32) {
    %c0_i32 = arith.constant 0 : i32
    %c0_i32_0 = arith.constant 0 : i32
    %c0_i32_1 = arith.constant 0 : i32
    return %c0_i32, %c0_i32_0 : i32, i32
  }
  func.func @transform_4(%arg0: i32) -> (i32, i32) {
    %c0_i32 = arith.constant 0 : i32
    %c0_i32_0 = arith.constant 0 : i32
    %c0_i32_1 = arith.constant 0 : i32
    return %c0_i32, %c0_i32_0 : i32, i32
  }
  func.func @transform_5(%arg0: i32) -> (i32, i32) {
    %c0_i32 = arith.constant 0 : i32
    %c0_i32_0 = arith.constant 0 : i32
    %c0_i32_1 = arith.constant 0 : i32
    return %c0_i32, %c0_i32_0 : i32, i32
  }
  func.func @transform_6(%arg0: i32) -> (i32, i32) {
    %c0_i32 = arith.constant 0 : i32
    %c0_i32_0 = arith.constant 0 : i32
    %c0_i32_1 = arith.constant 0 : i32
    return %c0_i32, %c0_i32_0 : i32, i32
  }
  func.func @transform_7(%arg0: i32) -> (i32, i32) {
    %c0_i32 = arith.constant 0 : i32
    %c0_i32_0 = arith.constant 0 : i32
    %c0_i32_1 = arith.constant 0 : i32
    return %c0_i32, %c0_i32_0 : i32, i32
  }
  func.func @transform_8(%arg0: i32) -> (i32, i32) {
    %c0_i32 = arith.constant 0 : i32
    %c0_i32_0 = arith.constant 0 : i32
    %c0_i32_1 = arith.constant 0 : i32
    return %c0_i32, %c0_i32_0 : i32, i32
  }
  func.func @transform_9(%arg0: i32) -> (i32, i32) {
    %c0_i32 = arith.constant 0 : i32
    %c0_i32_0 = arith.constant 0 : i32
    return %arg0, %c0_i32 : i32, i32
  }
}

</mosaic_0001>

<llo_original>
// kernel: _mlp_forward_impl.1
$region0: #{_mlp_forward_impl.1}
  #allocation0 [shape = 'u32[]', space=smem, size = 0x4, offset = 0x4, fixed_abs, tag = 'smem constant byte address 0x4 - core index']
  #allocation1 [shape = 'u32[144,128]{1,0:T(1,128)}', space=vmem, size = 0x12000, scoped, tag = 'internal scratch']
  %s0 = inlined_call_operand.vmem [shape: f32[8,16], index: 0, kind: input, shape index: {}]
  %s1 = inlined_call_operand.vmem [shape: f32[8,16], index: 1, kind: input, shape index: {}]
  %s2 = inlined_call_operand.vmem [shape: bf16[16,128], index: 2, kind: input, shape index: {}]
  %s3 = inlined_call_operand.vmem [shape: bf16[16,128], index: 3, kind: input, shape index: {}]
  %s4 = inlined_call_operand.vmem [shape: f32[1,128], index: 4, kind: input, shape index: {}]
  %s5 = inlined_call_operand.vmem [shape: bf16[128,128], index: 5, kind: input, shape index: {}]
  %s6 = inlined_call_operand.vmem [shape: f32[1,128], index: 6, kind: input, shape index: {}]
  %s7 = inlined_call_operand.vmem [shape: bf16[128,128], index: 7, kind: input, shape index: {}]
  %s8 = inlined_call_operand.vmem [shape: f32[1,128], index: 8, kind: input, shape index: {}]
  %s9 = inlined_call_operand.vmem [shape: f32[8,128], index: 9, kind: output, shape index: {}]
  %s10 = sld [smem:[#allocation0]]
  $region46: #{_mlp_forward_impl.1} parent=0
    _
  %s12 = ssub.s32 1, %s10
  %s13 = scalar_select 0, %s12, %s10
  // Predicated region
  $region2: #{_mlp_forward_impl.1} parent=0 // pred_check
    _
  $region3: #{_mlp_forward_impl.1} parent=0 // pred_check_branch
    %15 = sbr.rel (0) target = $region5
  $region4: #{_mlp_forward_impl.1} parent=0 // pred_region
    _
  $region5: #{_mlp_forward_impl.1} parent=0 // pred_fallthru
    _
  // Predicated region
  $region6: #{_mlp_forward_impl.1} parent=0 // pred_check
    _
  $region7: #{_mlp_forward_impl.1} parent=0 // pred_check_branch
    %17 = sbr.rel (0) target = $region9
  $region8: #{_mlp_forward_impl.1} parent=0 // pred_region
    _
  $region9: #{_mlp_forward_impl.1} parent=0 // pred_fallthru
    _
  // Predicated region
  $region10: #{_mlp_forward_impl.1} parent=0 // pred_check
    _
  $region11: #{_mlp_forward_impl.1} parent=0 // pred_check_branch
    %19 = sbr.rel (0) target = $region13
  $region12: #{_mlp_forward_impl.1} parent=0 // pred_region
    _
  $region13: #{_mlp_forward_impl.1} parent=0 // pred_fallthru
    _
  // Predicated region
  $region14: #{_mlp_forward_impl.1} parent=0 // pred_check
    _
  $region15: #{_mlp_forward_impl.1} parent=0 // pred_check_branch
    %21 = sbr.rel (0) target = $region17
  $region16: #{_mlp_forward_impl.1} parent=0 // pred_region
    _
  $region17: #{_mlp_forward_impl.1} parent=0 // pred_fallthru
    _
  // Predicated region
  $region18: #{_mlp_forward_impl.1} parent=0 // pred_check
    _
  $region19: #{_mlp_forward_impl.1} parent=0 // pred_check_branch
    %23 = sbr.rel (0) target = $region21
  $region20: #{_mlp_forward_impl.1} parent=0 // pred_region
    _
  $region21: #{_mlp_forward_impl.1} parent=0 // pred_fallthru
    _
  // Predicated region
  $region22: #{_mlp_forward_impl.1} parent=0 // pred_check
    _
  $region23: #{_mlp_forward_impl.1} parent=0 // pred_check_branch
    %25 = sbr.rel (0) target = $region25
  $region24: #{_mlp_forward_impl.1} parent=0 // pred_region
    _
  $region25: #{_mlp_forward_impl.1} parent=0 // pred_fallthru
    _
  // Predicated region
  $region26: #{_mlp_forward_impl.1} parent=0 // pred_check
    _
  $region27: #{_mlp_forward_impl.1} parent=0 // pred_check_branch
    %27 = sbr.rel (0) target = $region29
  $region28: #{_mlp_forward_impl.1} parent=0 // pred_region
    _
  $region29: #{_mlp_forward_impl.1} parent=0 // pred_fallthru
    _
  // Predicated region
  $region30: #{_mlp_forward_impl.1} parent=0 // pred_check
    _
  $region31: #{_mlp_forward_impl.1} parent=0 // pred_check_branch
    %29 = sbr.rel (0) target = $region33
  $region32: #{_mlp_forward_impl.1} parent=0 // pred_region
    _
  $region33: #{_mlp_forward_impl.1} parent=0 // pred_fallthru
    _
  // Predicated region
  $region34: #{_mlp_forward_impl.1} parent=0 // pred_check
    _
  $region35: #{_mlp_forward_impl.1} parent=0 // pred_check_branch
    %31 = sbr.rel (0) target = $region37
  $region36: #{_mlp_forward_impl.1} parent=0 // pred_region
    _
  $region37: #{_mlp_forward_impl.1} parent=0 // pred_fallthru
    _
  %v33 = vld [vmem:[%s0] sm:$0xff]
  %v34 = vld [vmem:[%s2] sm:$0xf]
  %v35 = vld [vmem:[%s2 + $0x4] sm:$0xf]
  %v36 = vpack.c.bf16 %v33, %v33
  %v37 = vld [vmem:[%s1] sm:$0xff]
  %v38 = vpack.c.bf16 %v37, %v37
  %v39 = vld [vmem:[%s3] sm:$0xf]
  %v40 = vld [vmem:[%s3 + $0x4] sm:$0xf]
  %v43 = vunpack.c.l.b16 %v39
  %v44 = vunpack.c.l.b16 %v40
  %v45 = vpack.c.b16 %v44, %v43
  %vm47 = vcmask 130048
  %v49 = vsel %vm47, %v38, 0
  %51 = vmatprep.subr.bf16.mxu0 0
  %52 = vmatpush1.bf16.msra.mxu0 0
  %53 = vmatprep.subr.bf16.mxu0 0
  %54 = vmatpush1.bf16.msra.mxu0 0
  %55 = vmatprep.subr.bf16.mxu0 0
  %56 = vmatpush1.bf16.msra.mxu0 0
  %57 = vmatprep.subr.bf16.mxu0 0
  %58 = vmatpush1.bf16.msra.mxu0 0
  %59 = vmatprep.subr.bf16.mxu0 0
  %60 = vmatpush1.bf16.msra.mxu0 0
  %61 = vmatprep.subr.bf16.mxu0 0
  %62 = vmatpush1.bf16.msra.mxu0 0
  %63 = vmatprep.subr.bf16.mxu0 0
  %64 = vmatpush1.bf16.msra.mxu0 0
  %65 = vmatprep.subr.bf16.mxu0 0
  %66 = vmatpush1.bf16.msra.mxu0 %v45
  %67 = vmatprep.subr.bf16.mxu0 0
  %68 = vmatpush2.bf16.msra.mxu0 0
  %69 = vmatprep.subr.bf16.mxu0 0
  %70 = vmatpush2.bf16.msra.mxu0 0
  %71 = vmatprep.subr.bf16.mxu0 0
  %72 = vmatpush2.bf16.msra.mxu0 0
  %73 = vmatprep.subr.bf16.mxu0 0
  %74 = vmatpush2.bf16.msra.mxu0 0
  %75 = vmatprep.subr.bf16.mxu0 0
  %76 = vmatpush2.bf16.msra.mxu0 0
  %77 = vmatprep.subr.bf16.mxu0 0
  %78 = vmatpush2.bf16.msra.mxu0 0
  %79 = vmatprep.subr.bf16.mxu0 0
  %80 = vmatpush2.bf16.msra.mxu0 0
  %81 = vmatprep.subr.bf16.mxu0 0
  %82 = vmatpush2.bf16.msra.mxu0 0
  %83 = vmatprep.mubr.bf16.mxu0 0
  %84 = vmatmul.mubr.bf16.gmra.mxu0 %v49
  %v85 = vpop.f32.mrf.mxu0
  %v86 = vadd.f32 0.0, %v85
  %v87 = vpop.f32.mrf.mxu0
  %v88 = vpop.f32.mrf.mxu0
  %v89 = vpop.f32.mrf.mxu0
  %90 = vdwg.mxu0
  %v93 = vunpack.c.l.b16 %v34
  %v94 = vunpack.c.l.b16 %v35
  %v95 = vpack.c.b16 %v94, %v93
  %v98 = vsel %vm47, %v36, 0
  %100 = vmatprep.subr.bf16.mxu0 0
  %101 = vmatpush1.bf16.msra.mxu0 0
  %102 = vmatprep.subr.bf16.mxu0 0
  %103 = vmatpush1.bf16.msra.mxu0 0
  %104 = vmatprep.subr.bf16.mxu0 0
  %105 = vmatpush1.bf16.msra.mxu0 0
  %106 = vmatprep.subr.bf16.mxu0 0
  %107 = vmatpush1.bf16.msra.mxu0 0
  %108 = vmatprep.subr.bf16.mxu0 0
  %109 = vmatpush1.bf16.msra.mxu0 0
  %110 = vmatprep.subr.bf16.mxu0 0
  %111 = vmatpush1.bf16.msra.mxu0 0
  %112 = vmatprep.subr.bf16.mxu0 0
  %113 = vmatpush1.bf16.msra.mxu0 0
  %114 = vmatprep.subr.bf16.mxu0 0
  %115 = vmatpush1.bf16.msra.mxu0 %v95
  %116 = vmatprep.subr.bf16.mxu0 0
  %117 = vmatpush2.bf16.msra.mxu0 0
  %118 = vmatprep.subr.bf16.mxu0 0
  %119 = vmatpush2.bf16.msra.mxu0 0
  %120 = vmatprep.subr.bf16.mxu0 0
  %121 = vmatpush2.bf16.msra.mxu0 0
  %122 = vmatprep.subr.bf16.mxu0 0
  %123 = vmatpush2.bf16.msra.mxu0 0
  %124 = vmatprep.subr.bf16.mxu0 0
  %125 = vmatpush2.bf16.msra.mxu0 0
  %126 = vmatprep.subr.bf16.mxu0 0
  %127 = vmatpush2.bf16.msra.mxu0 0
  %128 = vmatprep.subr.bf16.mxu0 0
  %129 = vmatpush2.bf16.msra.mxu0 0
  %130 = vmatprep.subr.bf16.mxu0 0
  %131 = vmatpush2.bf16.msra.mxu0 0
  %132 = vmatprep.mubr.bf16.mxu0 0
  %133 = vmatmul.mubr.bf16.gmra.mxu0 %v98
  %v134 = vpop.f32.mrf.mxu0
  %v135 = vadd.f32 %v86, %v134
  %v136 = vpop.f32.mrf.mxu0
  %v137 = vpop.f32.mrf.mxu0
  %v138 = vpop.f32.mrf.mxu0
  %139 = vdwg.mxu0
  %v140 = vld [vmem:[%s4] sm:$0x1]
  %v142 = vlaneseq
  %v143 = vshrl.u32 %v142, 7
  %v144 = vsub.s32 0, %v143
  %v145 = vrot.slane %v140, %v144
  %v147 = vadd.f32 %v135, %v145
  %v148 = vmax.f32 %v147, 0.0
  %v149 = vpack.c.bf16 %v148, %v148
  %v150 = vld [vmem:[%s5] sm:$0xf]
  %v151 = vld [vmem:[%s5 + $0x4] sm:$0xf]
  %v152 = vld [vmem:[%s5 + $0x8] sm:$0xf]
  %v153 = vld [vmem:[%s5 + $0xc] sm:$0xf]
  %v154 = vld [vmem:[%s5 + $0x10] sm:$0xf]
  %v155 = vld [vmem:[%s5 + $0x14] sm:$0xf]
  %v156 = vld [vmem:[%s5 + $0x18] sm:$0xf]
  %v157 = vld [vmem:[%s5 + $0x1c] sm:$0xf]
  %v158 = vld [vmem:[%s5 + $0x20] sm:$0xf]
  %v159 = vld [vmem:[%s5 + $0x24] sm:$0xf]
  %v160 = vld [vmem:[%s5 + $0x28] sm:$0xf]
  %v161 = vld [vmem:[%s5 + $0x2c] sm:$0xf]
  %v162 = vld [vmem:[%s5 + $0x30] sm:$0xf]
  %v163 = vld [vmem:[%s5 + $0x34] sm:$0xf]
  %v164 = vld [vmem:[%s5 + $0x38] sm:$0xf]
  %v165 = vld [vmem:[%s5 + $0x3c] sm:$0xf]
  %v166 = vld [vmem:[%s6] sm:$0x1]
  %v168 = vlaneseq
  %v169 = vshrl.u32 %v168, 7
  %v170 = vsub.s32 0, %v169
  %v171 = vrot.slane %v166, %v170
  %v189 = vunpack.c.l.b16 %v150
  %v190 = vunpack.c.l.b16 %v151
  %v191 = vunpack.c.l.b16 %v152
  %v192 = vunpack.c.l.b16 %v153
  %v193 = vunpack.c.l.b16 %v154
  %v194 = vunpack.c.l.b16 %v155
  %v195 = vunpack.c.l.b16 %v156
  %v196 = vunpack.c.l.b16 %v157
  %v197 = vunpack.c.l.b16 %v158
  %v198 = vunpack.c.l.b16 %v159
  %v199 = vunpack.c.l.b16 %v160
  %v200 = vunpack.c.l.b16 %v161
  %v201 = vunpack.c.l.b16 %v162
  %v202 = vunpack.c.l.b16 %v163
  %v203 = vunpack.c.l.b16 %v164
  %v204 = vunpack.c.l.b16 %v165
  %v205 = vpack.c.b16 %v190, %v189
  %v206 = vpack.c.b16 %v192, %v191
  %v207 = vpack.c.b16 %v194, %v193
  %v208 = vpack.c.b16 %v196, %v195
  %v209 = vpack.c.b16 %v198, %v197
  %v210 = vpack.c.b16 %v200, %v199
  %v211 = vpack.c.b16 %v202, %v201
  %v212 = vpack.c.b16 %v204, %v203
  %221 = vmatprep.subr.bf16.mxu0 0
  %222 = vmatpush1.bf16.msra.mxu0 %v212
  %223 = vmatprep.subr.bf16.mxu0 0
  %224 = vmatpush1.bf16.msra.mxu0 %v211
  %225 = vmatprep.subr.bf16.mxu0 0
  %226 = vmatpush1.bf16.msra.mxu0 %v210
  %227 = vmatprep.subr.bf16.mxu0 0
  %228 = vmatpush1.bf16.msra.mxu0 %v209
  %229 = vmatprep.subr.bf16.mxu0 0
  %230 = vmatpush1.bf16.msra.mxu0 %v208
  %231 = vmatprep.subr.bf16.mxu0 0
  %232 = vmatpush1.bf16.msra.mxu0 %v207
  %233 = vmatprep.subr.bf16.mxu0 0
  %234 = vmatpush1.bf16.msra.mxu0 %v206
  %235 = vmatprep.subr.bf16.mxu0 0
  %236 = vmatpush1.bf16.msra.mxu0 %v205
  %237 = vmatprep.subr.bf16.mxu0 0
  %238 = vmatpush2.bf16.msra.mxu0 0
  %239 = vmatprep.subr.bf16.mxu0 0
  %240 = vmatpush2.bf16.msra.mxu0 0
  %241 = vmatprep.subr.bf16.mxu0 0
  %242 = vmatpush2.bf16.msra.mxu0 0
  %243 = vmatprep.subr.bf16.mxu0 0
  %244 = vmatpush2.bf16.msra.mxu0 0
  %245 = vmatprep.subr.bf16.mxu0 0
  %246 = vmatpush2.bf16.msra.mxu0 0
  %247 = vmatprep.subr.bf16.mxu0 0
  %248 = vmatpush2.bf16.msra.mxu0 0
  %249 = vmatprep.subr.bf16.mxu0 0
  %250 = vmatpush2.bf16.msra.mxu0 0
  %251 = vmatprep.subr.bf16.mxu0 0
  %252 = vmatpush2.bf16.msra.mxu0 0
  %253 = vmatprep.mubr.bf16.mxu0 0
  %254 = vmatmul.mubr.bf16.gmra.mxu0 %v149
  %v255 = vpop.f32.mrf.mxu0
  %v256 = vadd.f32 %v171, %v255
  %v257 = vpop.f32.mrf.mxu0
  %v258 = vpop.f32.mrf.mxu0
  %v259 = vpop.f32.mrf.mxu0
  %260 = vdwg.mxu0
  %v261 = vmax.f32 %v256, 0.0
  %v262 = vpack.c.bf16 %v261, %v261
  %v263 = vld [vmem:[%s7] sm:$0xf]
  %v264 = vld [vmem:[%s7 + $0x4] sm:$0xf]
  %v265 = vld [vmem:[%s7 + $0x8] sm:$0xf]
  %v266 = vld [vmem:[%s7 + $0xc] sm:$0xf]
  %v267 = vld [vmem:[%s7 + $0x10] sm:$0xf]
  %v268 = vld [vmem:[%s7 + $0x14] sm:$0xf]
  %v269 = vld [vmem:[%s7 + $0x18] sm:$0xf]
  %v270 = vld [vmem:[%s7 + $0x1c] sm:$0xf]
  %v271 = vld [vmem:[%s7 + $0x20] sm:$0xf]
  %v272 = vld [vmem:[%s7 + $0x24] sm:$0xf]
  %v273 = vld [vmem:[%s7 + $0x28] sm:$0xf]
  %v274 = vld [vmem:[%s7 + $0x2c] sm:$0xf]
  %v275 = vld [vmem:[%s7 + $0x30] sm:$0xf]
  %v276 = vld [vmem:[%s7 + $0x34] sm:$0xf]
  %v277 = vld [vmem:[%s7 + $0x38] sm:$0xf]
  %v278 = vld [vmem:[%s7 + $0x3c] sm:$0xf]
  %v279 = vld [vmem:[%s8] sm:$0x1]
  %v281 = vlaneseq
  %v282 = vshrl.u32 %v281, 7
  %v283 = vsub.s32 0, %v282
  %v284 = vrot.slane %v279, %v283
  %v302 = vunpack.c.l.b16 %v263
  %v303 = vunpack.c.l.b16 %v264
  %v304 = vunpack.c.l.b16 %v265
  %v305 = vunpack.c.l.b16 %v266
  %v306 = vunpack.c.l.b16 %v267
  %v307 = vunpack.c.l.b16 %v268
  %v308 = vunpack.c.l.b16 %v269
  %v309 = vunpack.c.l.b16 %v270
  %v310 = vunpack.c.l.b16 %v271
  %v311 = vunpack.c.l.b16 %v272
  %v312 = vunpack.c.l.b16 %v273
  %v313 = vunpack.c.l.b16 %v274
  %v314 = vunpack.c.l.b16 %v275
  %v315 = vunpack.c.l.b16 %v276
  %v316 = vunpack.c.l.b16 %v277
  %v317 = vunpack.c.l.b16 %v278
  %v318 = vpack.c.b16 %v303, %v302
  %v319 = vpack.c.b16 %v305, %v304
  %v320 = vpack.c.b16 %v307, %v306
  %v321 = vpack.c.b16 %v309, %v308
  %v322 = vpack.c.b16 %v311, %v310
  %v323 = vpack.c.b16 %v313, %v312
  %v324 = vpack.c.b16 %v315, %v314
  %v325 = vpack.c.b16 %v317, %v316
  %334 = vmatprep.subr.bf16.mxu0 0
  %335 = vmatpush1.bf16.msra.mxu0 %v325
  %336 = vmatprep.subr.bf16.mxu0 0
  %337 = vmatpush1.bf16.msra.mxu0 %v324
  %338 = vmatprep.subr.bf16.mxu0 0
  %339 = vmatpush1.bf16.msra.mxu0 %v323
  %340 = vmatprep.subr.bf16.mxu0 0
  %341 = vmatpush1.bf16.msra.mxu0 %v322
  %342 = vmatprep.subr.bf16.mxu0 0
  %343 = vmatpush1.bf16.msra.mxu0 %v321
  %344 = vmatprep.subr.bf16.mxu0 0
  %345 = vmatpush1.bf16.msra.mxu0 %v320
  %346 = vmatprep.subr.bf16.mxu0 0
  %347 = vmatpush1.bf16.msra.mxu0 %v319
  %348 = vmatprep.subr.bf16.mxu0 0
  %349 = vmatpush1.bf16.msra.mxu0 %v318
  %350 = vmatprep.subr.bf16.mxu0 0
  %351 = vmatpush2.bf16.msra.mxu0 0
  %352 = vmatprep.subr.bf16.mxu0 0
  %353 = vmatpush2.bf16.msra.mxu0 0
  %354 = vmatprep.subr.bf16.mxu0 0
  %355 = vmatpush2.bf16.msra.mxu0 0
  %356 = vmatprep.subr.bf16.mxu0 0
  %357 = vmatpush2.bf16.msra.mxu0 0
  %358 = vmatprep.subr.bf16.mxu0 0
  %359 = vmatpush2.bf16.msra.mxu0 0
  %360 = vmatprep.subr.bf16.mxu0 0
  %361 = vmatpush2.bf16.msra.mxu0 0
  %362 = vmatprep.subr.bf16.mxu0 0
  %363 = vmatpush2.bf16.msra.mxu0 0
  %364 = vmatprep.subr.bf16.mxu0 0
  %365 = vmatpush2.bf16.msra.mxu0 0
  %366 = vmatprep.mubr.bf16.mxu0 0
  %367 = vmatmul.mubr.bf16.gmra.mxu0 %v262
  %v368 = vpop.f32.mrf.mxu0
  %v369 = vadd.f32 %v284, %v368
  %v370 = vpop.f32.mrf.mxu0
  %v371 = vpop.f32.mrf.mxu0
  %v372 = vpop.f32.mrf.mxu0
  %373 = vdwg.mxu0
  %374 = vst [vmem:[%s9] sm:$0xff] %v369
  %v375 = vadd.f32 %v369, %v33
  %376 = vst.msk [vmem:[%s9] sm:$0xff] %vm47, %v375
  // Predicated region
  $region38: #{_mlp_forward_impl.1} parent=0 // pred_check
    _
  $region39: #{_mlp_forward_impl.1} parent=0 // pred_check_branch
    %378 = sbr.rel (0) target = $region41
  $region40: #{_mlp_forward_impl.1} parent=0 // pred_region
    _
  $region41: #{_mlp_forward_impl.1} parent=0 // pred_fallthru
    _
  // Predicated region
  $region42: #{_mlp_forward_impl.1} parent=0 // pred_check
    _
  $region43: #{_mlp_forward_impl.1} parent=0 // pred_check_branch
    %380 = sbr.rel (0) target = $region45
  $region44: #{_mlp_forward_impl.1} parent=0 // pred_region
    _
  $region45: #{_mlp_forward_impl.1} parent=0 // pred_fallthru
    _

// kernel: _mlp_forward_impl.1
$region0: #{_mlp_forward_impl.1}
  #allocation0 [shape = 'u32[]', space=smem, size = 0x4, offset = 0x4, fixed_abs, tag = 'smem constant byte address 0x4 - core index']
  #allocation1 [shape = 'u32[144,128]{1,0:T(1,128)}', space=vmem, size = 0x12000, scoped, tag = 'internal scratch']
  %s0 = inlined_call_operand.vmem [shape: f32[8,16], index: 0, kind: input, shape index: {}]
  %s1 = inlined_call_operand.vmem [shape: f32[8,16], index: 1, kind: input, shape index: {}]
  %s2 = inlined_call_operand.vmem [shape: bf16[16,128], index: 2, kind: input, shape index: {}]
  %s3 = inlined_call_operand.vmem [shape: bf16[16,128], index: 3, kind: input, shape index: {}]
  %s4 = inlined_call_operand.vmem [shape: f32[1,128], index: 4, kind: input, shape index: {}]
  %s5 = inlined_call_operand.vmem [shape: bf16[128,128], index: 5, kind: input, shape index: {}]
  %s6 = inlined_call_operand.vmem [shape: f32[1,128], index: 6, kind: input, shape index: {}]
  %s7 = inlined_call_operand.vmem [shape: bf16[128,128], index: 7, kind: input, shape index: {}]
  %s8 = inlined_call_operand.vmem [shape: f32[1,128], index: 8, kind: input, shape index: {}]
  %s9 = inlined_call_operand.vmem [shape: f32[8,128], index: 9, kind: output, shape index: {}]
  %s10 = sld [smem:[#allocation0]]
  $region46: #{_mlp_forward_impl.1} parent=0
    _
  %s12 = ssub.s32 1, %s10
  %s13 = scalar_select 0, %s12, %s10
  // Predicated region
  $region2: #{_mlp_forward_impl.1} parent=0 // pred_check
    _
  $region3: #{_mlp_forward_impl.1} parent=0 // pred_check_branch
    %15 = sbr.rel (0) target = $region5
  $region4: #{_mlp_forward_impl.1} parent=0 // pred_region
    _
  $region5: #{_mlp_forward_impl.1} parent=0 // pred_fallthru
    _
  // Predicated region
  $region6: #{_mlp_forward_impl.1} parent=0 // pred_check
    _
  $region7: #{_mlp_forward_impl.1} parent=0 // pred_check_branch
    %17 = sbr.rel (0) target = $region9
  $region8: #{_mlp_forward_impl.1} parent=0 // pred_region
    _
  $region9: #{_mlp_forward_impl.1} parent=0 // pred_fallthru
    _
  // Predicated region
  $region10: #{_mlp_forward_impl.1} parent=0 // pred_check
    _
  $region11: #{_mlp_forward_impl.1} parent=0 // pred_check_branch
    %19 = sbr.rel (0) target = $region13
  $region12: #{_mlp_forward_impl.1} parent=0 // pred_region
    _
  $region13: #{_mlp_forward_impl.1} parent=0 // pred_fallthru
    _
  // Predicated region
  $region14: #{_mlp_forward_impl.1} parent=0 // pred_check
    _
  $region15: #{_mlp_forward_impl.1} parent=0 // pred_check_branch
    %21 = sbr.rel (0) target = $region17
  $region16: #{_mlp_forward_impl.1} parent=0 // pred_region
    _
  $region17: #{_mlp_forward_impl.1} parent=0 // pred_fallthru
    _
  // Predicated region
  $region18: #{_mlp_forward_impl.1} parent=0 // pred_check
    _
  $region19: #{_mlp_forward_impl.1} parent=0 // pred_check_branch
    %23 = sbr.rel (0) target = $region21
  $region20: #{_mlp_forward_impl.1} parent=0 // pred_region
    _
  $region21: #{_mlp_forward_impl.1} parent=0 // pred_fallthru
    _
  // Predicated region
  $region22: #{_mlp_forward_impl.1} parent=0 // pred_check
    _
  $region23: #{_mlp_forward_impl.1} parent=0 // pred_check_branch
    %25 = sbr.rel (0) target = $region25
  $region24: #{_mlp_forward_impl.1} parent=0 // pred_region
    _
  $region25: #{_mlp_forward_impl.1} parent=0 // pred_fallthru
    _
  // Predicated region
  $region26: #{_mlp_forward_impl.1} parent=0 // pred_check
    _
  $region27: #{_mlp_forward_impl.1} parent=0 // pred_check_branch
    %27 = sbr.rel (0) target = $region29
  $region28: #{_mlp_forward_impl.1} parent=0 // pred_region
    _
  $region29: #{_mlp_forward_impl.1} parent=0 // pred_fallthru
    _
  // Predicated region
  $region30: #{_mlp_forward_impl.1} parent=0 // pred_check
    _
  $region31: #{_mlp_forward_impl.1} parent=0 // pred_check_branch
    %29 = sbr.rel (0) target = $region33
  $region32: #{_mlp_forward_impl.1} parent=0 // pred_region
    _
  $region33: #{_mlp_forward_impl.1} parent=0 // pred_fallthru
    _
  // Predicated region
  $region34: #{_mlp_forward_impl.1} parent=0 // pred_check
    _
  $region35: #{_mlp_forward_impl.1} parent=0 // pred_check_branch
    %31 = sbr.rel (0) target = $region37
  $region36: #{_mlp_forward_impl.1} parent=0 // pred_region
    _
  $region37: #{_mlp_forward_impl.1} parent=0 // pred_fallthru
    _
  %v33 = vld [vmem:[%s0] sm:$0xff]
  %v34 = vld [vmem:[%s2] sm:$0xf]
  %v35 = vld [vmem:[%s2 + $0x4] sm:$0xf]
  %v36 = vpack.c.bf16 %v33, %v33
  %v37 = vld [vmem:[%s1] sm:$0xff]
  %v38 = vpack.c.bf16 %v37, %v37
  %v39 = vld [vmem:[%s3] sm:$0xf]
  %v40 = vld [vmem:[%s3 + $0x4] sm:$0xf]
  %v43 = vunpack.c.l.b16 %v39
  %v44 = vunpack.c.l.b16 %v40
  %v45 = vpack.c.b16 %v44, %v43
  %vm47 = vcmask 130048
  %v49 = vsel %vm47, %v38, 0
  %51 = vmatprep.subr.bf16.mxu0 0
  %52 = vmatpush1.bf16.msra.mxu0 0
  %53 = vmatprep.subr.bf16.mxu0 0
  %54 = vmatpush1.bf16.msra.mxu0 0
  %55 = vmatprep.subr.bf16.mxu0 0
  %56 = vmatpush1.bf16.msra.mxu0 0
  %57 = vmatprep.subr.bf16.mxu0 0
  %58 = vmatpush1.bf16.msra.mxu0 0
  %59 = vmatprep.subr.bf16.mxu0 0
  %60 = vmatpush1.bf16.msra.mxu0 0
  %61 = vmatprep.subr.bf16.mxu0 0
  %62 = vmatpush1.bf16.msra.mxu0 0
  %63 = vmatprep.subr.bf16.mxu0 0
  %64 = vmatpush1.bf16.msra.mxu0 0
  %65 = vmatprep.subr.bf16.mxu0 0
  %66 = vmatpush1.bf16.msra.mxu0 %v45
  %67 = vmatprep.subr.bf16.mxu0 0
  %68 = vmatpush2.bf16.msra.mxu0 0
  %69 = vmatprep.subr.bf16.mxu0 0
  %70 = vmatpush2.bf16.msra.mxu0 0
  %71 = vmatprep.subr.bf16.mxu0 0
  %72 = vmatpush2.bf16.msra.mxu0 0
  %73 = vmatprep.subr.bf16.mxu0 0
  %74 = vmatpush2.bf16.msra.mxu0 0
  %75 = vmatprep.subr.bf16.mxu0 0
  %76 = vmatpush2.bf16.msra.mxu0 0
  %77 = vmatprep.subr.bf16.mxu0 0
  %78 = vmatpush2.bf16.msra.mxu0 0
  %79 = vmatprep.subr.bf16.mxu0 0
  %80 = vmatpush2.bf16.msra.mxu0 0
  %81 = vmatprep.subr.bf16.mxu0 0
  %82 = vmatpush2.bf16.msra.mxu0 0
  %83 = vmatprep.mubr.bf16.mxu0 0
  %84 = vmatmul.mubr.bf16.gmra.mxu0 %v49
  %v85 = vpop.f32.mrf.mxu0
  %v86 = vadd.f32 0.0, %v85
  %v87 = vpop.f32.mrf.mxu0
  %v88 = vpop.f32.mrf.mxu0
  %v89 = vpop.f32.mrf.mxu0
  %90 = vdwg.mxu0
  %v93 = vunpack.c.l.b16 %v34
  %v94 = vunpack.c.l.b16 %v35
  %v95 = vpack.c.b16 %v94, %v93
  %v98 = vsel %vm47, %v36, 0
  %100 = vmatprep.subr.bf16.mxu0 0
  %101 = vmatpush1.bf16.msra.mxu0 0
  %102 = vmatprep.subr.bf16.mxu0 0
  %103 = vmatpush1.bf16.msra.mxu0 0
  %104 = vmatprep.subr.bf16.mxu0 0
  %105 = vmatpush1.bf16.msra.mxu0 0
  %106 = vmatprep.subr.bf16.mxu0 0
  %107 = vmatpush1.bf16.msra.mxu0 0
  %108 = vmatprep.subr.bf16.mxu0 0
  %109 = vmatpush1.bf16.msra.mxu0 0
  %110 = vmatprep.subr.bf16.mxu0 0
  %111 = vmatpush1.bf16.msra.mxu0 0
  %112 = vmatprep.subr.bf16.mxu0 0
  %113 = vmatpush1.bf16.msra.mxu0 0
  %114 = vmatprep.subr.bf16.mxu0 0
  %115 = vmatpush1.bf16.msra.mxu0 %v95
  %116 = vmatprep.subr.bf16.mxu0 0
  %117 = vmatpush2.bf16.msra.mxu0 0
  %118 = vmatprep.subr.bf16.mxu0 0
  %119 = vmatpush2.bf16.msra.mxu0 0
  %120 = vmatprep.subr.bf16.mxu0 0
  %121 = vmatpush2.bf16.msra.mxu0 0
  %122 = vmatprep.subr.bf16.mxu0 0
  %123 = vmatpush2.bf16.msra.mxu0 0
  %124 = vmatprep.subr.bf16.mxu0 0
  %125 = vmatpush2.bf16.msra.mxu0 0
  %126 = vmatprep.subr.bf16.mxu0 0
  %127 = vmatpush2.bf16.msra.mxu0 0
  %128 = vmatprep.subr.bf16.mxu0 0
  %129 = vmatpush2.bf16.msra.mxu0 0
  %130 = vmatprep.subr.bf16.mxu0 0
  %131 = vmatpush2.bf16.msra.mxu0 0
  %132 = vmatprep.mubr.bf16.mxu0 0
  %133 = vmatmul.mubr.bf16.gmra.mxu0 %v98
  %v134 = vpop.f32.mrf.mxu0
  %v135 = vadd.f32 %v86, %v134
  %v136 = vpop.f32.mrf.mxu0
  %v137 = vpop.f32.mrf.mxu0
  %v138 = vpop.f32.mrf.mxu0
  %139 = vdwg.mxu0
  %v140 = vld [vmem:[%s4] sm:$0x1]
  %v142 = vlaneseq
  %v143 = vshrl.u32 %v142, 7
  %v144 = vsub.s32 0, %v143
  %v145 = vrot.slane %v140, %v144
  %v147 = vadd.f32 %v135, %v145
  %v148 = vmax.f32 %v147, 0.0
  %v149 = vpack.c.bf16 %v148, %v148
  %v150 = vld [vmem:[%s5] sm:$0xf]
  %v151 = vld [vmem:[%s5 + $0x4] sm:$0xf]
  %v152 = vld [vmem:[%s5 + $0x8] sm:$0xf]
  %v153 = vld [vmem:[%s5 + $0xc] sm:$0xf]
  %v154 = vld [vmem:[%s5 + $0x10] sm:$0xf]
  %v155 = vld [vmem:[%s5 + $0x14] sm:$0xf]
  %v156 = vld [vmem:[%s5 + $0x18] sm:$0xf]
  %v157 = vld [vmem:[%s5 + $0x1c] sm:$0xf]
  %v158 = vld [vmem:[%s5 + $0x20] sm:$0xf]
  %v159 = vld [vmem:[%s5 + $0x24] sm:$0xf]
  %v160 = vld [vmem:[%s5 + $0x28] sm:$0xf]
  %v161 = vld [vmem:[%s5 + $0x2c] sm:$0xf]
  %v162 = vld [vmem:[%s5 + $0x30] sm:$0xf]
  %v163 = vld [vmem:[%s5 + $0x34] sm:$0xf]
  %v164 = vld [vmem:[%s5 + $0x38] sm:$0xf]
  %v165 = vld [vmem:[%s5 + $0x3c] sm:$0xf]
  %v166 = vld [vmem:[%s6] sm:$0x1]
  %v168 = vlaneseq
  %v169 = vshrl.u32 %v168, 7
  %v170 = vsub.s32 0, %v169
  %v171 = vrot.slane %v166, %v170
  %v189 = vunpack.c.l.b16 %v150
  %v190 = vunpack.c.l.b16 %v151
  %v191 = vunpack.c.l.b16 %v152
  %v192 = vunpack.c.l.b16 %v153
  %v193 = vunpack.c.l.b16 %v154
  %v194 = vunpack.c.l.b16 %v155
  %v195 = vunpack.c.l.b16 %v156
  %v196 = vunpack.c.l.b16 %v157
  %v197 = vunpack.c.l.b16 %v158
  %v198 = vunpack.c.l.b16 %v159
  %v199 = vunpack.c.l.b16 %v160
  %v200 = vunpack.c.l.b16 %v161
  %v201 = vunpack.c.l.b16 %v162
  %v202 = vunpack.c.l.b16 %v163
  %v203 = vunpack.c.l.b16 %v164
  %v204 = vunpack.c.l.b16 %v165
  %v205 = vpack.c.b16 %v190, %v189
  %v206 = vpack.c.b16 %v192, %v191
  %v207 = vpack.c.b16 %v194, %v193
  %v208 = vpack.c.b16 %v196, %v195
  %v209 = vpack.c.b16 %v198, %v197
  %v210 = vpack.c.b16 %v200, %v199
  %v211 = vpack.c.b16 %v202, %v201
  %v212 = vpack.c.b16 %v204, %v203
  %221 = vmatprep.subr.bf16.mxu0 0
  %222 = vmatpush1.bf16.msra.mxu0 %v212
  %223 = vmatprep.subr.bf16.mxu0 0
  %224 = vmatpush1.bf16.msra.mxu0 %v211
  %225 = vmatprep.subr.bf16.mxu0 0
  %226 = vmatpush1.bf16.msra.mxu0 %v210
  %227 = vmatprep.subr.bf16.mxu0 0
  %228 = vmatpush1.bf16.msra.mxu0 %v209
  %229 = vmatprep.subr.bf16.mxu0 0
  %230 = vmatpush1.bf16.msra.mxu0 %v208
  %231 = vmatprep.subr.bf16.mxu0 0
  %232 = vmatpush1.bf16.msra.mxu0 %v207
  %233 = vmatprep.subr.bf16.mxu0 0
  %234 = vmatpush1.bf16.msra.mxu0 %v206
  %235 = vmatprep.subr.bf16.mxu0 0
  %236 = vmatpush1.bf16.msra.mxu0 %v205
  %237 = vmatprep.subr.bf16.mxu0 0
  %238 = vmatpush2.bf16.msra.mxu0 0
  %239 = vmatprep.subr.bf16.mxu0 0
  %240 = vmatpush2.bf16.msra.mxu0 0
  %241 = vmatprep.subr.bf16.mxu0 0
  %242 = vmatpush2.bf16.msra.mxu0 0
  %243 = vmatprep.subr.bf16.mxu0 0
  %244 = vmatpush2.bf16.msra.mxu0 0
  %245 = vmatprep.subr.bf16.mxu0 0
  %246 = vmatpush2.bf16.msra.mxu0 0
  %247 = vmatprep.subr.bf16.mxu0 0
  %248 = vmatpush2.bf16.msra.mxu0 0
  %249 = vmatprep.subr.bf16.mxu0 0
  %250 = vmatpush2.bf16.msra.mxu0 0
  %251 = vmatprep.subr.bf16.mxu0 0
  %252 = vmatpush2.bf16.msra.mxu0 0
  %253 = vmatprep.mubr.bf16.mxu0 0
  %254 = vmatmul.mubr.bf16.gmra.mxu0 %v149
  %v255 = vpop.f32.mrf.mxu0
  %v256 = vadd.f32 %v171, %v255
  %v257 = vpop.f32.mrf.mxu0
  %v258 = vpop.f32.mrf.mxu0
  %v259 = vpop.f32.mrf.mxu0
  %260 = vdwg.mxu0
  %v261 = vmax.f32 %v256, 0.0
  %v262 = vpack.c.bf16 %v261, %v261
  %v263 = vld [vmem:[%s7] sm:$0xf]
  %v264 = vld [vmem:[%s7 + $0x4] sm:$0xf]
  %v265 = vld [vmem:[%s7 + $0x8] sm:$0xf]
  %v266 = vld [vmem:[%s7 + $0xc] sm:$0xf]
  %v267 = vld [vmem:[%s7 + $0x10] sm:$0xf]
  %v268 = vld [vmem:[%s7 + $0x14] sm:$0xf]
  %v269 = vld [vmem:[%s7 + $0x18] sm:$0xf]
  %v270 = vld [vmem:[%s7 + $0x1c] sm:$0xf]
  %v271 = vld [vmem:[%s7 + $0x20] sm:$0xf]
  %v272 = vld [vmem:[%s7 + $0x24] sm:$0xf]
  %v273 = vld [vmem:[%s7 + $0x28] sm:$0xf]
  %v274 = vld [vmem:[%s7 + $0x2c] sm:$0xf]
  %v275 = vld [vmem:[%s7 + $0x30] sm:$0xf]
  %v276 = vld [vmem:[%s7 + $0x34] sm:$0xf]
  %v277 = vld [vmem:[%s7 + $0x38] sm:$0xf]
  %v278 = vld [vmem:[%s7 + $0x3c] sm:$0xf]
  %v279 = vld [vmem:[%s8] sm:$0x1]
  %v281 = vlaneseq
  %v282 = vshrl.u32 %v281, 7
  %v283 = vsub.s32 0, %v282
  %v284 = vrot.slane %v279, %v283
  %v302 = vunpack.c.l.b16 %v263
  %v303 = vunpack.c.l.b16 %v264
  %v304 = vunpack.c.l.b16 %v265
  %v305 = vunpack.c.l.b16 %v266
  %v306 = vunpack.c.l.b16 %v267
  %v307 = vunpack.c.l.b16 %v268
  %v308 = vunpack.c.l.b16 %v269
  %v309 = vunpack.c.l.b16 %v270
  %v310 = vunpack.c.l.b16 %v271
  %v311 = vunpack.c.l.b16 %v272
  %v312 = vunpack.c.l.b16 %v273
  %v313 = vunpack.c.l.b16 %v274
  %v314 = vunpack.c.l.b16 %v275
  %v315 = vunpack.c.l.b16 %v276
  %v316 = vunpack.c.l.b16 %v277
  %v317 = vunpack.c.l.b16 %v278
  %v318 = vpack.c.b16 %v303, %v302
  %v319 = vpack.c.b16 %v305, %v304
  %v320 = vpack.c.b16 %v307, %v306
  %v321 = vpack.c.b16 %v309, %v308
  %v322 = vpack.c.b16 %v311, %v310
  %v323 = vpack.c.b16 %v313, %v312
  %v324 = vpack.c.b16 %v315, %v314
  %v325 = vpack.c.b16 %v317, %v316
  %334 = vmatprep.subr.bf16.mxu0 0
  %335 = vmatpush1.bf16.msra.mxu0 %v325
  %336 = vmatprep.subr.bf16.mxu0 0
  %337 = vmatpush1.bf16.msra.mxu0 %v324
  %338 = vmatprep.subr.bf16.mxu0 0
  %339 = vmatpush1.bf16.msra.mxu0 %v323
  %340 = vmatprep.subr.bf16.mxu0 0
  %341 = vmatpush1.bf16.msra.mxu0 %v322
  %342 = vmatprep.subr.bf16.mxu0 0
  %343 = vmatpush1.bf16.msra.mxu0 %v321
  %344 = vmatprep.subr.bf16.mxu0 0
  %345 = vmatpush1.bf16.msra.mxu0 %v320
  %346 = vmatprep.subr.bf16.mxu0 0
  %347 = vmatpush1.bf16.msra.mxu0 %v319
  %348 = vmatprep.subr.bf16.mxu0 0
  %349 = vmatpush1.bf16.msra.mxu0 %v318
  %350 = vmatprep.subr.bf16.mxu0 0
  %351 = vmatpush2.bf16.msra.mxu0 0
  %352 = vmatprep.subr.bf16.mxu0 0
  %353 = vmatpush2.bf16.msra.mxu0 0
  %354 = vmatprep.subr.bf16.mxu0 0
  %355 = vmatpush2.bf16.msra.mxu0 0
  %356 = vmatprep.subr.bf16.mxu0 0
  %357 = vmatpush2.bf16.msra.mxu0 0
  %358 = vmatprep.subr.bf16.mxu0 0
  %359 = vmatpush2.bf16.msra.mxu0 0
  %360 = vmatprep.subr.bf16.mxu0 0
  %361 = vmatpush2.bf16.msra.mxu0 0
  %362 = vmatprep.subr.bf16.mxu0 0
  %363 = vmatpush2.bf16.msra.mxu0 0
  %364 = vmatprep.subr.bf16.mxu0 0
  %365 = vmatpush2.bf16.msra.mxu0 0
  %366 = vmatprep.mubr.bf16.mxu0 0
  %367 = vmatmul.mubr.bf16.gmra.mxu0 %v262
  %v368 = vpop.f32.mrf.mxu0
  %v369 = vadd.f32 %v284, %v368
  %v370 = vpop.f32.mrf.mxu0
  %v371 = vpop.f32.mrf.mxu0
  %v372 = vpop.f32.mrf.mxu0
  %373 = vdwg.mxu0
  %374 = vst [vmem:[%s9] sm:$0xff] %v369
  %v375 = vadd.f32 %v369, %v33
  %376 = vst.msk [vmem:[%s9] sm:$0xff] %vm47, %v375
  // Predicated region
  $region38: #{_mlp_forward_impl.1} parent=0 // pred_check
    _
  $region39: #{_mlp_forward_impl.1} parent=0 // pred_check_branch
    %378 = sbr.rel (0) target = $region41
  $region40: #{_mlp_forward_impl.1} parent=0 // pred_region
    _
  $region41: #{_mlp_forward_impl.1} parent=0 // pred_fallthru
    _
  // Predicated region
  $region42: #{_mlp_forward_impl.1} parent=0 // pred_check
    _
  $region43: #{_mlp_forward_impl.1} parent=0 // pred_check_branch
    %380 = sbr.rel (0) target = $region45
  $region44: #{_mlp_forward_impl.1} parent=0 // pred_region
    _
  $region45: #{_mlp_forward_impl.1} parent=0 // pred_fallthru
    _

</llo_original>
